<compile_context>
chip_gen: v7x
topology: tpu7x:2x2x1
jax: 0.10.0
libtpu: 0.0.40
codegen_flags: <defaults>
</compile_context>

<pallas_src>
import jax
import jax.numpy as jnp
from jax.experimental import pallas as pl
from jax.experimental.pallas import tpu as pltpu

# ---- small, module-consistent dimensions ----
B = 2          # batch
S = 8          # args.seq_length
E = 32         # args.emb_size (encoder output width)
H = 32         # args.hidden_size  (bidirectional: H//2 per direction)
Hd = H // 2
L = 9          # args.labels_num
VOCAB = 100
NSEG = 4


# ---------------------------------------------------------------------------
# Pallas kernel: fused bidirectional LSTM recurrence + output linear + argmax.
# Pre-packed, lane-dense weights (built once in prepare_head_params):
#   win:  (2E, 8*Hd)  block-diagonal: rows 0:E -> fwd gate cols, rows E:2E -> rev gate cols
#   bin:  (1, 8*Hd)   combined per-gate bias, same column order
#   whh:  (2*Hd, 8*Hd) block-diagonal: rows 0:Hd -> fwd cols, rows Hd:2Hd -> rev cols
#   wout: (2*Hd, L)   unsplit output weight ([fwd | rev] rows)
#   bo:   (1, L)
# Gate column order: [i_f,i_r | f_f,f_r | o_f,o_r | g_f,g_r]  (sigmoid 0:96, tanh 96:128)
# ---------------------------------------------------------------------------
def _luke_lstm_kernel(x2_ref,                  # (S*B, 2E) f32, row t*B+b = [x[t,b] | x[S-1-t,b]]
                      win_ref,                 # (2E, 8*Hd)
                      bin_ref,                 # (1, 8*Hd)
                      whh_ref,                 # (2*Hd, 8*Hd)
                      wout_ref,                # (2*Hd, L)
                      bo_ref,                  # (1, L)
                      pred_ref):               # (S*B, 1) int32

    # All timesteps / gates / both directions in ONE lane-dense input-projection
    # matmul (+bias).  Result is (S*B, 128) f32 -> stays in vregs.
    gx = (jnp.dot(x2_ref[...], win_ref[...], preferred_element_type=jnp.float32)
          + bin_ref[...])

    whh = whh_ref[...]                         # (2*Hd, 8*Hd) block-diagonal

    # Packed loop-carried state: [h_f | h_r], [c_f | c_r]  (B, 2*Hd)
    h = jnp.zeros((B, 2 * Hd), jnp.float32)
    c = jnp.zeros((B, 2 * Hd), jnp.float32)

    hf_rows = [None] * S                       # fwd hidden, indexed by time t
    hr_rows = [None] * S                       # rev hidden, indexed by time t

    # Static unroll over S (small).  One fused recurrent matmul per step for both
    # directions; the rev direction's correct timestep is already baked into gx.
    for step in range(S):
        gx_t = gx[step * B:(step + 1) * B, :]              # (B, 8*Hd), static slice of a value
        z = gx_t + jnp.dot(h, whh, preferred_element_type=jnp.float32)

        sig = jax.nn.sigmoid(z[:, :6 * Hd])                # i_f,i_r,f_f,f_r,o_f,o_r
        g_t = jnp.tanh(z[:, 6 * Hd:])                      # g_f,g_r
        i_g = sig[:, :2 * Hd]
        f_g = sig[:, 2 * Hd:4 * Hd]
        o_g = sig[:, 4 * Hd:6 * Hd]

        c = f_g * c + i_g * g_t
        h = o_g * jnp.tanh(c)

        hf_rows[step] = h[:, :Hd]                          # fwd half is time `step`
        hr_rows[S - 1 - step] = h[:, Hd:]                  # rev half is time S-1-step

    # Batched output head over all (t, b): one matmul on the lane-packed hidden slab.
    h_f = jnp.concatenate(hf_rows, axis=0)                 # (S*B, Hd), time order
    h_r = jnp.concatenate(hr_rows, axis=0)                 # (S*B, Hd), time order
    h_all = jnp.concatenate([h_f, h_r], axis=1)            # (S*B, 2*Hd)

    logits = (jnp.dot(h_all, wout_ref[...], preferred_element_type=jnp.float32)
              + bo_ref[...])                                # (S*B, L)

    # argmax(log_softmax(logits)) == argmax(logits): log_softmax is dead work
    # for the prediction output, so it is dropped.  First-max tie-break matches
    # jnp.argmax / torch.argmax semantics.
    col = jax.lax.broadcasted_iota(jnp.int32, logits.shape, 1).astype(jnp.float32)
    is_max = logits == jnp.max(logits, axis=-1, keepdims=True)
    idx = jnp.min(jnp.where(is_max, col, jnp.float32(L)),
                  axis=-1, keepdims=True)                   # (S*B, 1)
    pred_ref[...] = idx.astype(jnp.int32)


# ---------------------------------------------------------------------------
# One-time weight packing (NOT in the per-call jitted path).
# Raw gate order of the per-gate stacks is [i, f, g, o] (as in the reference);
# packed column super-block order is [i, f, o, g] (sigmoid first, tanh last),
# with fwd / rev interleaved per gate.
# ---------------------------------------------------------------------------
def prepare_head_params(head_params):
    wih_f, whh_f, b_f, wih_r, whh_r, b_r, wof, wob, bo = head_params
    gate_order = (0, 1, 3, 2)                               # i, f, o, g

    z_e = jnp.zeros((E, Hd), jnp.float32)
    z_h = jnp.zeros((Hd, Hd), jnp.float32)

    win_cols, whh_cols, b_cols = [], [], []
    for g in gate_order:
        # fwd column block (only fwd rows non-zero), then rev column block.
        win_cols.append(jnp.concatenate([wih_f[g], z_e], axis=0))   # (2E, Hd)
        win_cols.append(jnp.concatenate([z_e, wih_r[g]], axis=0))
        whh_cols.append(jnp.concatenate([whh_f[g], z_h], axis=0))   # (2*Hd, Hd)
        whh_cols.append(jnp.concatenate([z_h, whh_r[g]], axis=0))
        b_cols.append(b_f[g])                                       # (1, Hd)
        b_cols.append(b_r[g])

    win_big = jnp.concatenate(win_cols, axis=1).astype(jnp.float32)  # (2E, 8*Hd)
    whh_big = jnp.concatenate(whh_cols, axis=1).astype(jnp.float32)  # (2*Hd, 8*Hd)
    bin_big = jnp.concatenate(b_cols, axis=1).astype(jnp.float32)    # (1, 8*Hd)
    wout = jnp.concatenate([wof, wob], axis=0).astype(jnp.float32)   # (2*Hd, L)
    # TODO(synk): real nn.LSTM checkpoints carry b_ih and b_hh separately; sum
    # them into the single per-gate bias used here when porting weights.
    return (win_big, bin_big, whh_big, wout, bo.astype(jnp.float32))


@jax.jit
def luke_lstm_head(x_bse, packed_head_params):
    """BiLSTM + Linear + (log_softmax+)argmax.  x_bse: (B, S, E) -> (B, S) i32."""
    win_big, bin_big, whh_big, wout, bo = packed_head_params

    # time-major flatten: row index = t*B + b.  Lane-concat a time-reversed copy
    # so the reverse direction's timestep sits in the same row as the forward one.
    x_tme = jnp.transpose(x_bse, (1, 0, 2)).astype(jnp.float32)       # (S, B, E)
    x2 = jnp.concatenate([x_tme, x_tme[::-1]], axis=-1).reshape(S * B, 2 * E)

    ins = (x2, win_big, bin_big, whh_big, wout, bo)
    vmem = pl.BlockSpec(memory_space=pltpu.MemorySpace.VMEM)

    pred_flat = pl.pallas_call(
        _luke_lstm_kernel,
        out_shape=jax.ShapeDtypeStruct((S * B, 1), jnp.int32),
        in_specs=[vmem] * len(ins),
        out_specs=vmem,
    )(*ins)

    # rows are ordered t*B + b  ->  (B, S)
    return jnp.transpose(pred_flat.reshape(S, B), (1, 0))


# ---------------------------------------------------------------------------
# Glue (plain JAX): encoder stub + forward wrapper
# ---------------------------------------------------------------------------
def encoder_stub(enc_params, word_ids, word_segment_ids, word_attention_mask, pos, vm):
    # TODO(synk): the LUKE/K-BERT encoder is an external module passed into
    # LukeTaggerLSTM.__init__; it is stubbed here with a deterministic
    # embedding-sum producing word_sequence_output (B, S, E).  `vm` is unused.
    word_tab, seg_tab, pos_tab = enc_params
    x = word_tab[word_ids] + seg_tab[word_segment_ids] + pos_tab[pos]
    return x * word_attention_mask[..., None].astype(x.dtype)


def luke_tagger_lstm_forward(params, word_ids, word_segment_ids, word_attention_mask,
                             labels=None, pos=None, vm=None, use_kg=True):
    enc_params, packed_head_params = params
    if not use_kg:
        vm = None
    x = encoder_stub(enc_params, word_ids, word_segment_ids, word_attention_mask, pos, vm)
    predict = luke_lstm_head(x.astype(jnp.float32), packed_head_params)  # == view(-1, seq_length)
    return predict


# ---------------------------------------------------------------------------
# Pure-JAX reference (for correctness check) — uses the RAW (unpacked) weights.
# ---------------------------------------------------------------------------
def ref_predict(x_bse, head_params):
    wih_f, whh_f, b_f, wih_r, whh_r, b_r, wof, wob, bo = head_params

    def run(wih, whh, bias, reverse):
        h = jnp.zeros((B, Hd), jnp.float32)
        c = jnp.zeros((B, Hd), jnp.float32)
        outs = [None] * S
        order = range(S - 1, -1, -1) if reverse else range(S)
        for t in order:
            xt = x_bse[:, t, :]
            ig = jax.nn.sigmoid(xt @ wih[0] + h @ whh[0] + bias[0])
            fg = jax.nn.sigmoid(xt @ wih[1] + h @ whh[1] + bias[1])
            gg = jnp.tanh(xt @ wih[2] + h @ whh[2] + bias[2])
            og = jax.nn.sigmoid(xt @ wih[3] + h @ whh[3] + bias[3])
            c = fg * c + ig * gg
            h = og * jnp.tanh(c)
            outs[t] = h
        return jnp.stack(outs, axis=1)                     # (B, S, Hd)

    hf = run(wih_f, whh_f, b_f, False)
    hb = run(wih_r, whh_r, b_r, True)
    logits = (jnp.einsum('bsh,hl->bsl', hf, wof)
              + jnp.einsum('bsh,hl->bsl', hb, wob) + bo[0])
    logp = jax.nn.log_softmax(logits, axis=-1)
    return jnp.argmax(logp, axis=-1)                       # (B, S)


# ---------------------------------------------------------------------------
if __name__ == "__main__":
    key = jax.random.PRNGKey(0)
    ks = jax.random.split(key, 16)

    def u(k, shape, scale=0.25):
        return jax.random.uniform(k, shape, jnp.float32, -scale, scale)

    # deterministic synthetic parameters (shapes follow the module's __init__);
    # gate order of the raw stacks is [i, f, g, o] as in the reference.
    word_tab = u(ks[0], (VOCAB, E), 1.0)
    seg_tab = u(ks[1], (NSEG, E), 1.0)
    pos_tab = u(ks[2], (S, E), 1.0)
    wih_f = u(ks[3], (4, E, Hd));  whh_f = u(ks[4], (4, Hd, Hd));  b_f = u(ks[5], (4, 1, Hd))
    wih_r = u(ks[6], (4, E, Hd));  whh_r = u(ks[7], (4, Hd, Hd));  b_r = u(ks[8], (4, 1, Hd))
    wof = u(ks[9], (Hd, L), 0.5);  wob = u(ks[10], (Hd, L), 0.5);  bo = u(ks[11], (1, L), 0.5)

    enc_params = (word_tab, seg_tab, pos_tab)
    head_params = (wih_f, whh_f, b_f, wih_r, whh_r, b_r, wof, wob, bo)

    # one-time lane-dense weight packing, OUTSIDE the per-call jitted path.
    packed_head_params = jax.tree.map(jax.block_until_ready,
                                      prepare_head_params(head_params))
    params = (enc_params, packed_head_params)

    # deterministic example inputs
    word_ids = jax.random.randint(ks[12], (B, S), 1, VOCAB)
    word_segment_ids = jnp.zeros((B, S), jnp.int32)
    word_attention_mask = jnp.ones((B, S), jnp.float32)
    labels = jax.random.randint(ks[13], (B, S), 0, L)
    pos = jnp.broadcast_to(jnp.arange(S, dtype=jnp.int32), (B, S))
    vm = jnp.ones((B, S, S), jnp.float32)   # visibility matrix (only the encoder uses it)

    predict = luke_tagger_lstm_forward(params, word_ids, word_segment_ids,
                                       word_attention_mask, labels=labels,
                                       pos=pos, vm=vm, use_kg=True)
    predict = jax.block_until_ready(predict)

    # correctness check vs. pure-JAX reference
    x = encoder_stub(enc_params, word_ids, word_segment_ids, word_attention_mask, pos, vm)
    ref = ref_predict(x.astype(jnp.float32), head_params)
    assert predict.shape == (B, S), predict.shape
    assert bool(jnp.array_equal(predict, ref)), (predict, ref)

    print("KERNEL_OK")
</pallas_src>

<mosaic_0001>
module attributes {stable_mosaic.version = 11 : i64} {
  func.func @_luke_lstm_kernel(%arg0: memref<16x64xf32, #tpu.memory_space<vmem>>, %arg1: memref<64x128xf32, #tpu.memory_space<vmem>>, %arg2: memref<1x128xf32, #tpu.memory_space<vmem>>, %arg3: memref<32x128xf32, #tpu.memory_space<vmem>>, %arg4: memref<32x9xf32, #tpu.memory_space<vmem>>, %arg5: memref<1x9xf32, #tpu.memory_space<vmem>>, %arg6: memref<16x1xi32, #tpu.memory_space<vmem>>) attributes {dimension_semantics = [], scalar_prefetch = 0 : i64, scratch_operands = 0 : i64, tpu.core_type = #tpu.core_type<tc>} {
    %c0 = arith.constant 0 : index
    %c0_0 = arith.constant 0 : index
    %0 = vector.load %arg0[%c0, %c0_0] : memref<16x64xf32, #tpu.memory_space<vmem>>, vector<16x64xf32>
    %c0_1 = arith.constant 0 : index
    %c0_2 = arith.constant 0 : index
    %1 = vector.load %arg1[%c0_1, %c0_2] : memref<64x128xf32, #tpu.memory_space<vmem>>, vector<64x128xf32>
    %cst = arith.constant dense<0.000000e+00> : vector<16x128xf32>
    %2 = tpu.matmul %0, %1, %cst {dimension_numbers = #tpu.dot_dimension_numbers<[1], [0], [0], [1], [0, 0, 1, 1], [], []>} : vector<16x64xf32>, vector<64x128xf32>, vector<16x128xf32> -> vector<16x128xf32>
    %c0_3 = arith.constant 0 : index
    %c0_4 = arith.constant 0 : index
    %3 = vector.load %arg2[%c0_3, %c0_4] : memref<1x128xf32, #tpu.memory_space<vmem>>, vector<1x128xf32>
    %4 = vector.broadcast %3 : vector<1x128xf32> to vector<16x128xf32>
    %5 = arith.addf %2, %4 : vector<16x128xf32>
    %c0_5 = arith.constant 0 : index
    %c0_6 = arith.constant 0 : index
    %6 = vector.load %arg3[%c0_5, %c0_6] : memref<32x128xf32, #tpu.memory_space<vmem>>, vector<32x128xf32>
    %cst_7 = arith.constant 0.000000e+00 : f32
    %7 = vector.broadcast %cst_7 : f32 to vector<2x32xf32>
    %cst_8 = arith.constant 0.000000e+00 : f32
    %8 = vector.broadcast %cst_8 : f32 to vector<2x32xf32>
    %9 = vector.extract_strided_slice %5 {offsets = [0, 0], sizes = [2, 128], strides = [1, 1]} : vector<16x128xf32> to vector<2x128xf32>
    %cst_9 = arith.constant dense<0.000000e+00> : vector<2x128xf32>
    %10 = tpu.matmul %7, %6, %cst_9 {dimension_numbers = #tpu.dot_dimension_numbers<[1], [0], [0], [1], [0, 0, 1, 1], [], []>} : vector<2x32xf32>, vector<32x128xf32>, vector<2x128xf32> -> vector<2x128xf32>
    %11 = arith.addf %9, %10 : vector<2x128xf32>
    %12 = vector.extract_strided_slice %11 {offsets = [0, 0], sizes = [2, 96], strides = [1, 1]} : vector<2x128xf32> to vector<2x96xf32>
    %13 = arith.negf %12 : vector<2x96xf32>
    %14 = math.exp %13 : vector<2x96xf32>
    %cst_10 = arith.constant 1.000000e+00 : f32
    %15 = vector.broadcast %cst_10 : f32 to vector<2x96xf32>
    %16 = arith.addf %15, %14 : vector<2x96xf32>
    %17 = arith.divf %15, %16 : vector<2x96xf32>
    %18 = vector.extract_strided_slice %11 {offsets = [0, 96], sizes = [2, 32], strides = [1, 1]} : vector<2x128xf32> to vector<2x32xf32>
    %19 = math.tanh %18 : vector<2x32xf32>
    %20 = vector.extract_strided_slice %17 {offsets = [0, 0], sizes = [2, 32], strides = [1, 1]} : vector<2x96xf32> to vector<2x32xf32>
    %21 = vector.extract_strided_slice %17 {offsets = [0, 32], sizes = [2, 32], strides = [1, 1]} : vector<2x96xf32> to vector<2x32xf32>
    %22 = vector.extract_strided_slice %17 {offsets = [0, 64], sizes = [2, 32], strides = [1, 1]} : vector<2x96xf32> to vector<2x32xf32>
    %23 = arith.mulf %21, %8 : vector<2x32xf32>
    %24 = arith.mulf %20, %19 : vector<2x32xf32>
    %25 = arith.addf %23, %24 : vector<2x32xf32>
    %26 = math.tanh %25 : vector<2x32xf32>
    %27 = arith.mulf %22, %26 : vector<2x32xf32>
    %28 = vector.extract_strided_slice %27 {offsets = [0, 0], sizes = [2, 16], strides = [1, 1]} : vector<2x32xf32> to vector<2x16xf32>
    %29 = vector.extract_strided_slice %27 {offsets = [0, 16], sizes = [2, 16], strides = [1, 1]} : vector<2x32xf32> to vector<2x16xf32>
    %30 = vector.extract_strided_slice %5 {offsets = [2, 0], sizes = [2, 128], strides = [1, 1]} : vector<16x128xf32> to vector<2x128xf32>
    %cst_11 = arith.constant dense<0.000000e+00> : vector<2x128xf32>
    %31 = tpu.matmul %27, %6, %cst_11 {dimension_numbers = #tpu.dot_dimension_numbers<[1], [0], [0], [1], [0, 0, 1, 1], [], []>} : vector<2x32xf32>, vector<32x128xf32>, vector<2x128xf32> -> vector<2x128xf32>
    %32 = arith.addf %30, %31 : vector<2x128xf32>
    %33 = vector.extract_strided_slice %32 {offsets = [0, 0], sizes = [2, 96], strides = [1, 1]} : vector<2x128xf32> to vector<2x96xf32>
    %34 = arith.negf %33 : vector<2x96xf32>
    %35 = math.exp %34 : vector<2x96xf32>
    %cst_12 = arith.constant 1.000000e+00 : f32
    %36 = vector.broadcast %cst_12 : f32 to vector<2x96xf32>
    %37 = arith.addf %36, %35 : vector<2x96xf32>
    %38 = arith.divf %36, %37 : vector<2x96xf32>
    %39 = vector.extract_strided_slice %32 {offsets = [0, 96], sizes = [2, 32], strides = [1, 1]} : vector<2x128xf32> to vector<2x32xf32>
    %40 = math.tanh %39 : vector<2x32xf32>
    %41 = vector.extract_strided_slice %38 {offsets = [0, 0], sizes = [2, 32], strides = [1, 1]} : vector<2x96xf32> to vector<2x32xf32>
    %42 = vector.extract_strided_slice %38 {offsets = [0, 32], sizes = [2, 32], strides = [1, 1]} : vector<2x96xf32> to vector<2x32xf32>
    %43 = vector.extract_strided_slice %38 {offsets = [0, 64], sizes = [2, 32], strides = [1, 1]} : vector<2x96xf32> to vector<2x32xf32>
    %44 = arith.mulf %42, %25 : vector<2x32xf32>
    %45 = arith.mulf %41, %40 : vector<2x32xf32>
    %46 = arith.addf %44, %45 : vector<2x32xf32>
    %47 = math.tanh %46 : vector<2x32xf32>
    %48 = arith.mulf %43, %47 : vector<2x32xf32>
    %49 = vector.extract_strided_slice %48 {offsets = [0, 0], sizes = [2, 16], strides = [1, 1]} : vector<2x32xf32> to vector<2x16xf32>
    %50 = vector.extract_strided_slice %48 {offsets = [0, 16], sizes = [2, 16], strides = [1, 1]} : vector<2x32xf32> to vector<2x16xf32>
    %51 = vector.extract_strided_slice %5 {offsets = [4, 0], sizes = [2, 128], strides = [1, 1]} : vector<16x128xf32> to vector<2x128xf32>
    %cst_13 = arith.constant dense<0.000000e+00> : vector<2x128xf32>
    %52 = tpu.matmul %48, %6, %cst_13 {dimension_numbers = #tpu.dot_dimension_numbers<[1], [0], [0], [1], [0, 0, 1, 1], [], []>} : vector<2x32xf32>, vector<32x128xf32>, vector<2x128xf32> -> vector<2x128xf32>
    %53 = arith.addf %51, %52 : vector<2x128xf32>
    %54 = vector.extract_strided_slice %53 {offsets = [0, 0], sizes = [2, 96], strides = [1, 1]} : vector<2x128xf32> to vector<2x96xf32>
    %55 = arith.negf %54 : vector<2x96xf32>
    %56 = math.exp %55 : vector<2x96xf32>
    %cst_14 = arith.constant 1.000000e+00 : f32
    %57 = vector.broadcast %cst_14 : f32 to vector<2x96xf32>
    %58 = arith.addf %57, %56 : vector<2x96xf32>
    %59 = arith.divf %57, %58 : vector<2x96xf32>
    %60 = vector.extract_strided_slice %53 {offsets = [0, 96], sizes = [2, 32], strides = [1, 1]} : vector<2x128xf32> to vector<2x32xf32>
    %61 = math.tanh %60 : vector<2x32xf32>
    %62 = vector.extract_strided_slice %59 {offsets = [0, 0], sizes = [2, 32], strides = [1, 1]} : vector<2x96xf32> to vector<2x32xf32>
    %63 = vector.extract_strided_slice %59 {offsets = [0, 32], sizes = [2, 32], strides = [1, 1]} : vector<2x96xf32> to vector<2x32xf32>
    %64 = vector.extract_strided_slice %59 {offsets = [0, 64], sizes = [2, 32], strides = [1, 1]} : vector<2x96xf32> to vector<2x32xf32>
    %65 = arith.mulf %63, %46 : vector<2x32xf32>
    %66 = arith.mulf %62, %61 : vector<2x32xf32>
    %67 = arith.addf %65, %66 : vector<2x32xf32>
    %68 = math.tanh %67 : vector<2x32xf32>
    %69 = arith.mulf %64, %68 : vector<2x32xf32>
    %70 = vector.extract_strided_slice %69 {offsets = [0, 0], sizes = [2, 16], strides = [1, 1]} : vector<2x32xf32> to vector<2x16xf32>
    %71 = vector.extract_strided_slice %69 {offsets = [0, 16], sizes = [2, 16], strides = [1, 1]} : vector<2x32xf32> to vector<2x16xf32>
    %72 = vector.extract_strided_slice %5 {offsets = [6, 0], sizes = [2, 128], strides = [1, 1]} : vector<16x128xf32> to vector<2x128xf32>
    %cst_15 = arith.constant dense<0.000000e+00> : vector<2x128xf32>
    %73 = tpu.matmul %69, %6, %cst_15 {dimension_numbers = #tpu.dot_dimension_numbers<[1], [0], [0], [1], [0, 0, 1, 1], [], []>} : vector<2x32xf32>, vector<32x128xf32>, vector<2x128xf32> -> vector<2x128xf32>
    %74 = arith.addf %72, %73 : vector<2x128xf32>
    %75 = vector.extract_strided_slice %74 {offsets = [0, 0], sizes = [2, 96], strides = [1, 1]} : vector<2x128xf32> to vector<2x96xf32>
    %76 = arith.negf %75 : vector<2x96xf32>
    %77 = math.exp %76 : vector<2x96xf32>
    %cst_16 = arith.constant 1.000000e+00 : f32
    %78 = vector.broadcast %cst_16 : f32 to vector<2x96xf32>
    %79 = arith.addf %78, %77 : vector<2x96xf32>
    %80 = arith.divf %78, %79 : vector<2x96xf32>
    %81 = vector.extract_strided_slice %74 {offsets = [0, 96], sizes = [2, 32], strides = [1, 1]} : vector<2x128xf32> to vector<2x32xf32>
    %82 = math.tanh %81 : vector<2x32xf32>
    %83 = vector.extract_strided_slice %80 {offsets = [0, 0], sizes = [2, 32], strides = [1, 1]} : vector<2x96xf32> to vector<2x32xf32>
    %84 = vector.extract_strided_slice %80 {offsets = [0, 32], sizes = [2, 32], strides = [1, 1]} : vector<2x96xf32> to vector<2x32xf32>
    %85 = vector.extract_strided_slice %80 {offsets = [0, 64], sizes = [2, 32], strides = [1, 1]} : vector<2x96xf32> to vector<2x32xf32>
    %86 = arith.mulf %84, %67 : vector<2x32xf32>
    %87 = arith.mulf %83, %82 : vector<2x32xf32>
    %88 = arith.addf %86, %87 : vector<2x32xf32>
    %89 = math.tanh %88 : vector<2x32xf32>
    %90 = arith.mulf %85, %89 : vector<2x32xf32>
    %91 = vector.extract_strided_slice %90 {offsets = [0, 0], sizes = [2, 16], strides = [1, 1]} : vector<2x32xf32> to vector<2x16xf32>
    %92 = vector.extract_strided_slice %90 {offsets = [0, 16], sizes = [2, 16], strides = [1, 1]} : vector<2x32xf32> to vector<2x16xf32>
    %93 = vector.extract_strided_slice %5 {offsets = [8, 0], sizes = [2, 128], strides = [1, 1]} : vector<16x128xf32> to vector<2x128xf32>
    %cst_17 = arith.constant dense<0.000000e+00> : vector<2x128xf32>
    %94 = tpu.matmul %90, %6, %cst_17 {dimension_numbers = #tpu.dot_dimension_numbers<[1], [0], [0], [1], [0, 0, 1, 1], [], []>} : vector<2x32xf32>, vector<32x128xf32>, vector<2x128xf32> -> vector<2x128xf32>
    %95 = arith.addf %93, %94 : vector<2x128xf32>
    %96 = vector.extract_strided_slice %95 {offsets = [0, 0], sizes = [2, 96], strides = [1, 1]} : vector<2x128xf32> to vector<2x96xf32>
    %97 = arith.negf %96 : vector<2x96xf32>
    %98 = math.exp %97 : vector<2x96xf32>
    %cst_18 = arith.constant 1.000000e+00 : f32
    %99 = vector.broadcast %cst_18 : f32 to vector<2x96xf32>
    %100 = arith.addf %99, %98 : vector<2x96xf32>
    %101 = arith.divf %99, %100 : vector<2x96xf32>
    %102 = vector.extract_strided_slice %95 {offsets = [0, 96], sizes = [2, 32], strides = [1, 1]} : vector<2x128xf32> to vector<2x32xf32>
    %103 = math.tanh %102 : vector<2x32xf32>
    %104 = vector.extract_strided_slice %101 {offsets = [0, 0], sizes = [2, 32], strides = [1, 1]} : vector<2x96xf32> to vector<2x32xf32>
    %105 = vector.extract_strided_slice %101 {offsets = [0, 32], sizes = [2, 32], strides = [1, 1]} : vector<2x96xf32> to vector<2x32xf32>
    %106 = vector.extract_strided_slice %101 {offsets = [0, 64], sizes = [2, 32], strides = [1, 1]} : vector<2x96xf32> to vector<2x32xf32>
    %107 = arith.mulf %105, %88 : vector<2x32xf32>
    %108 = arith.mulf %104, %103 : vector<2x32xf32>
    %109 = arith.addf %107, %108 : vector<2x32xf32>
    %110 = math.tanh %109 : vector<2x32xf32>
    %111 = arith.mulf %106, %110 : vector<2x32xf32>
    %112 = vector.extract_strided_slice %111 {offsets = [0, 0], sizes = [2, 16], strides = [1, 1]} : vector<2x32xf32> to vector<2x16xf32>
    %113 = vector.extract_strided_slice %111 {offsets = [0, 16], sizes = [2, 16], strides = [1, 1]} : vector<2x32xf32> to vector<2x16xf32>
    %114 = vector.extract_strided_slice %5 {offsets = [10, 0], sizes = [2, 128], strides = [1, 1]} : vector<16x128xf32> to vector<2x128xf32>
    %cst_19 = arith.constant dense<0.000000e+00> : vector<2x128xf32>
    %115 = tpu.matmul %111, %6, %cst_19 {dimension_numbers = #tpu.dot_dimension_numbers<[1], [0], [0], [1], [0, 0, 1, 1], [], []>} : vector<2x32xf32>, vector<32x128xf32>, vector<2x128xf32> -> vector<2x128xf32>
    %116 = arith.addf %114, %115 : vector<2x128xf32>
    %117 = vector.extract_strided_slice %116 {offsets = [0, 0], sizes = [2, 96], strides = [1, 1]} : vector<2x128xf32> to vector<2x96xf32>
    %118 = arith.negf %117 : vector<2x96xf32>
    %119 = math.exp %118 : vector<2x96xf32>
    %cst_20 = arith.constant 1.000000e+00 : f32
    %120 = vector.broadcast %cst_20 : f32 to vector<2x96xf32>
    %121 = arith.addf %120, %119 : vector<2x96xf32>
    %122 = arith.divf %120, %121 : vector<2x96xf32>
    %123 = vector.extract_strided_slice %116 {offsets = [0, 96], sizes = [2, 32], strides = [1, 1]} : vector<2x128xf32> to vector<2x32xf32>
    %124 = math.tanh %123 : vector<2x32xf32>
    %125 = vector.extract_strided_slice %122 {offsets = [0, 0], sizes = [2, 32], strides = [1, 1]} : vector<2x96xf32> to vector<2x32xf32>
    %126 = vector.extract_strided_slice %122 {offsets = [0, 32], sizes = [2, 32], strides = [1, 1]} : vector<2x96xf32> to vector<2x32xf32>
    %127 = vector.extract_strided_slice %122 {offsets = [0, 64], sizes = [2, 32], strides = [1, 1]} : vector<2x96xf32> to vector<2x32xf32>
    %128 = arith.mulf %126, %109 : vector<2x32xf32>
    %129 = arith.mulf %125, %124 : vector<2x32xf32>
    %130 = arith.addf %128, %129 : vector<2x32xf32>
    %131 = math.tanh %130 : vector<2x32xf32>
    %132 = arith.mulf %127, %131 : vector<2x32xf32>
    %133 = vector.extract_strided_slice %132 {offsets = [0, 0], sizes = [2, 16], strides = [1, 1]} : vector<2x32xf32> to vector<2x16xf32>
    %134 = vector.extract_strided_slice %132 {offsets = [0, 16], sizes = [2, 16], strides = [1, 1]} : vector<2x32xf32> to vector<2x16xf32>
    %135 = vector.extract_strided_slice %5 {offsets = [12, 0], sizes = [2, 128], strides = [1, 1]} : vector<16x128xf32> to vector<2x128xf32>
    %cst_21 = arith.constant dense<0.000000e+00> : vector<2x128xf32>
    %136 = tpu.matmul %132, %6, %cst_21 {dimension_numbers = #tpu.dot_dimension_numbers<[1], [0], [0], [1], [0, 0, 1, 1], [], []>} : vector<2x32xf32>, vector<32x128xf32>, vector<2x128xf32> -> vector<2x128xf32>
    %137 = arith.addf %135, %136 : vector<2x128xf32>
    %138 = vector.extract_strided_slice %137 {offsets = [0, 0], sizes = [2, 96], strides = [1, 1]} : vector<2x128xf32> to vector<2x96xf32>
    %139 = arith.negf %138 : vector<2x96xf32>
    %140 = math.exp %139 : vector<2x96xf32>
    %cst_22 = arith.constant 1.000000e+00 : f32
    %141 = vector.broadcast %cst_22 : f32 to vector<2x96xf32>
    %142 = arith.addf %141, %140 : vector<2x96xf32>
    %143 = arith.divf %141, %142 : vector<2x96xf32>
    %144 = vector.extract_strided_slice %137 {offsets = [0, 96], sizes = [2, 32], strides = [1, 1]} : vector<2x128xf32> to vector<2x32xf32>
    %145 = math.tanh %144 : vector<2x32xf32>
    %146 = vector.extract_strided_slice %143 {offsets = [0, 0], sizes = [2, 32], strides = [1, 1]} : vector<2x96xf32> to vector<2x32xf32>
    %147 = vector.extract_strided_slice %143 {offsets = [0, 32], sizes = [2, 32], strides = [1, 1]} : vector<2x96xf32> to vector<2x32xf32>
    %148 = vector.extract_strided_slice %143 {offsets = [0, 64], sizes = [2, 32], strides = [1, 1]} : vector<2x96xf32> to vector<2x32xf32>
    %149 = arith.mulf %147, %130 : vector<2x32xf32>
    %150 = arith.mulf %146, %145 : vector<2x32xf32>
    %151 = arith.addf %149, %150 : vector<2x32xf32>
    %152 = math.tanh %151 : vector<2x32xf32>
    %153 = arith.mulf %148, %152 : vector<2x32xf32>
    %154 = vector.extract_strided_slice %153 {offsets = [0, 0], sizes = [2, 16], strides = [1, 1]} : vector<2x32xf32> to vector<2x16xf32>
    %155 = vector.extract_strided_slice %153 {offsets = [0, 16], sizes = [2, 16], strides = [1, 1]} : vector<2x32xf32> to vector<2x16xf32>
    %156 = vector.extract_strided_slice %5 {offsets = [14, 0], sizes = [2, 128], strides = [1, 1]} : vector<16x128xf32> to vector<2x128xf32>
    %cst_23 = arith.constant dense<0.000000e+00> : vector<2x128xf32>
    %157 = tpu.matmul %153, %6, %cst_23 {dimension_numbers = #tpu.dot_dimension_numbers<[1], [0], [0], [1], [0, 0, 1, 1], [], []>} : vector<2x32xf32>, vector<32x128xf32>, vector<2x128xf32> -> vector<2x128xf32>
    %158 = arith.addf %156, %157 : vector<2x128xf32>
    %159 = vector.extract_strided_slice %158 {offsets = [0, 0], sizes = [2, 96], strides = [1, 1]} : vector<2x128xf32> to vector<2x96xf32>
    %160 = arith.negf %159 : vector<2x96xf32>
    %161 = math.exp %160 : vector<2x96xf32>
    %cst_24 = arith.constant 1.000000e+00 : f32
    %162 = vector.broadcast %cst_24 : f32 to vector<2x96xf32>
    %163 = arith.addf %162, %161 : vector<2x96xf32>
    %164 = arith.divf %162, %163 : vector<2x96xf32>
    %165 = vector.extract_strided_slice %158 {offsets = [0, 96], sizes = [2, 32], strides = [1, 1]} : vector<2x128xf32> to vector<2x32xf32>
    %166 = math.tanh %165 : vector<2x32xf32>
    %167 = vector.extract_strided_slice %164 {offsets = [0, 0], sizes = [2, 32], strides = [1, 1]} : vector<2x96xf32> to vector<2x32xf32>
    %168 = vector.extract_strided_slice %164 {offsets = [0, 32], sizes = [2, 32], strides = [1, 1]} : vector<2x96xf32> to vector<2x32xf32>
    %169 = vector.extract_strided_slice %164 {offsets = [0, 64], sizes = [2, 32], strides = [1, 1]} : vector<2x96xf32> to vector<2x32xf32>
    %170 = arith.mulf %168, %151 : vector<2x32xf32>
    %171 = arith.mulf %167, %166 : vector<2x32xf32>
    %172 = arith.addf %170, %171 : vector<2x32xf32>
    %173 = math.tanh %172 : vector<2x32xf32>
    %174 = arith.mulf %169, %173 : vector<2x32xf32>
    %175 = vector.extract_strided_slice %174 {offsets = [0, 0], sizes = [2, 16], strides = [1, 1]} : vector<2x32xf32> to vector<2x16xf32>
    %176 = vector.extract_strided_slice %174 {offsets = [0, 16], sizes = [2, 16], strides = [1, 1]} : vector<2x32xf32> to vector<2x16xf32>
    %177 = tpu.concatenate %28, %49, %70, %91, %112, %133, %154, %175 in 0 : vector<2x16xf32>, vector<2x16xf32>, vector<2x16xf32>, vector<2x16xf32>, vector<2x16xf32>, vector<2x16xf32>, vector<2x16xf32>, vector<2x16xf32> -> vector<16x16xf32>
    %178 = tpu.concatenate %176, %155, %134, %113, %92, %71, %50, %29 in 0 : vector<2x16xf32>, vector<2x16xf32>, vector<2x16xf32>, vector<2x16xf32>, vector<2x16xf32>, vector<2x16xf32>, vector<2x16xf32>, vector<2x16xf32> -> vector<16x16xf32>
    %179 = tpu.concatenate %177, %178 in 1 : vector<16x16xf32>, vector<16x16xf32> -> vector<16x32xf32>
    %c0_25 = arith.constant 0 : index
    %c0_26 = arith.constant 0 : index
    %180 = vector.load %arg4[%c0_25, %c0_26] : memref<32x9xf32, #tpu.memory_space<vmem>>, vector<32x9xf32>
    %cst_27 = arith.constant dense<0.000000e+00> : vector<16x9xf32>
    %181 = tpu.matmul %179, %180, %cst_27 {dimension_numbers = #tpu.dot_dimension_numbers<[1], [0], [0], [1], [0, 0, 1, 1], [], []>} : vector<16x32xf32>, vector<32x9xf32>, vector<16x9xf32> -> vector<16x9xf32>
    %c0_28 = arith.constant 0 : index
    %c0_29 = arith.constant 0 : index
    %182 = vector.load %arg5[%c0_28, %c0_29] : memref<1x9xf32, #tpu.memory_space<vmem>>, vector<1x9xf32>
    %183 = vector.broadcast %182 : vector<1x9xf32> to vector<16x9xf32>
    %184 = arith.addf %181, %183 : vector<16x9xf32>
    %185 = tpu.iota {dimensions = array<i32: 1>} : vector<16x9xi32>
    %186 = arith.sitofp %185 : vector<16x9xi32> to vector<16x9xf32>
    %cst_30 = arith.constant dense<0xFF800000> : vector<16xf32>
    %187 = vector.multi_reduction <maximumf>, %184, %cst_30 [1] : vector<16x9xf32> to vector<16xf32>
    %188 = vector.shape_cast %187 : vector<16xf32> to vector<16x1xf32>
    %189 = vector.broadcast %188 : vector<16x1xf32> to vector<16x9xf32>
    %190 = arith.cmpf oeq, %184, %189 : vector<16x9xf32>
    %cst_31 = arith.constant 9.000000e+00 : f32
    %191 = vector.broadcast %cst_31 : f32 to vector<16x9xf32>
    %192 = arith.select %190, %186, %191 : vector<16x9xi1>, vector<16x9xf32>
    %cst_32 = arith.constant dense<0x7F800000> : vector<16xf32>
    %193 = vector.multi_reduction <minimumf>, %192, %cst_32 [1] : vector<16x9xf32> to vector<16xf32>
    %194 = vector.shape_cast %193 : vector<16xf32> to vector<16x1xf32>
    %195 = arith.fptosi %194 : vector<16x1xf32> to vector<16x1xi32>
    %c0_33 = arith.constant 0 : index
    %c0_34 = arith.constant 0 : index
    %196 = vector.load %arg6[%c0_33, %c0_34] : memref<16x1xi32, #tpu.memory_space<vmem>>, vector<16x1xi32>
    tpu.vector_store %arg6[%c0_33, %c0_34], %195 {strides = array<i32>} : memref<16x1xi32, #tpu.memory_space<vmem>>, vector<16x1xi32>,
    return
  }
}

</mosaic_0001>

<llo_original>
// kernel: luke_lstm_head.1
$region0: #{luke_lstm_head.1}
  #allocation0 [shape = 'u32[]', space=smem, size = 0x4, offset = 0x4, fixed_abs, tag = 'smem constant byte address 0x4 - core index']
  #allocation1 [shape = 'u32[144,128]{1,0:T(1,128)}', space=vmem, size = 0x12000, scoped, tag = 'internal scratch']
  %s0 = inlined_call_operand.vmem [shape: f32[16,64], index: 0, kind: input, shape index: {}]
  %s1 = inlined_call_operand.vmem [shape: f32[64,128], index: 1, kind: input, shape index: {}]
  %s2 = inlined_call_operand.vmem [shape: f32[1,128], index: 2, kind: input, shape index: {}]
  %s3 = inlined_call_operand.vmem [shape: f32[32,128], index: 3, kind: input, shape index: {}]
  %s4 = inlined_call_operand.vmem [shape: f32[32,9], index: 4, kind: input, shape index: {}]
  %s5 = inlined_call_operand.vmem [shape: f32[1,9], index: 5, kind: input, shape index: {}]
  %s6 = inlined_call_operand.vmem [shape: s32[16,1], index: 6, kind: output, shape index: {}]
  %s7 = sld [smem:[#allocation0]]
  $region34: #{luke_lstm_head.1} parent=0
    _
  %s9 = ssub.s32 1, %s7
  %s10 = scalar_select 0, %s9, %s7
  // Predicated region
  $region2: #{luke_lstm_head.1} parent=0 // pred_check
    _
  $region3: #{luke_lstm_head.1} parent=0 // pred_check_branch
    %12 = sbr.rel (0) target = $region5
  $region4: #{luke_lstm_head.1} parent=0 // pred_region
    _
  $region5: #{luke_lstm_head.1} parent=0 // pred_fallthru
    _
  // Predicated region
  $region6: #{luke_lstm_head.1} parent=0 // pred_check
    _
  $region7: #{luke_lstm_head.1} parent=0 // pred_check_branch
    %14 = sbr.rel (0) target = $region9
  $region8: #{luke_lstm_head.1} parent=0 // pred_region
    _
  $region9: #{luke_lstm_head.1} parent=0 // pred_fallthru
    _
  // Predicated region
  $region10: #{luke_lstm_head.1} parent=0 // pred_check
    _
  $region11: #{luke_lstm_head.1} parent=0 // pred_check_branch
    %16 = sbr.rel (0) target = $region13
  $region12: #{luke_lstm_head.1} parent=0 // pred_region
    _
  $region13: #{luke_lstm_head.1} parent=0 // pred_fallthru
    _
  // Predicated region
  $region14: #{luke_lstm_head.1} parent=0 // pred_check
    _
  $region15: #{luke_lstm_head.1} parent=0 // pred_check_branch
    %18 = sbr.rel (0) target = $region17
  $region16: #{luke_lstm_head.1} parent=0 // pred_region
    _
  $region17: #{luke_lstm_head.1} parent=0 // pred_fallthru
    _
  // Predicated region
  $region18: #{luke_lstm_head.1} parent=0 // pred_check
    _
  $region19: #{luke_lstm_head.1} parent=0 // pred_check_branch
    %20 = sbr.rel (0) target = $region21
  $region20: #{luke_lstm_head.1} parent=0 // pred_region
    _
  $region21: #{luke_lstm_head.1} parent=0 // pred_fallthru
    _
  // Predicated region
  $region22: #{luke_lstm_head.1} parent=0 // pred_check
    _
  $region23: #{luke_lstm_head.1} parent=0 // pred_check_branch
    %22 = sbr.rel (0) target = $region25
  $region24: #{luke_lstm_head.1} parent=0 // pred_region
    _
  $region25: #{luke_lstm_head.1} parent=0 // pred_fallthru
    _
  %v23 = vld [vmem:[%s0] sm:$0xff]
  %v24 = vld [vmem:[%s0 + $0x8] sm:$0xff]
  %v25 = vld [vmem:[%s1] sm:$0xff]
  %v26 = vld [vmem:[%s1 + $0x8] sm:$0xff]
  %v27 = vld [vmem:[%s1 + $0x10] sm:$0xff]
  %v28 = vld [vmem:[%s1 + $0x18] sm:$0xff]
  %v29 = vld [vmem:[%s1 + $0x20] sm:$0xff]
  %v30 = vld [vmem:[%s1 + $0x28] sm:$0xff]
  %v31 = vld [vmem:[%s1 + $0x30] sm:$0xff]
  %v32 = vld [vmem:[%s1 + $0x38] sm:$0xff]
  %v33 = vld [vmem:[%s2] sm:$0x1]
  %v35 = vlaneseq
  %v36 = vshrl.u32 %v35, 7
  %v37 = vsub.s32 0, %v36
  %v38 = vrot.slane %v33, %v37
  %vm40 = vcmask 523264
  %v42 = vsel %vm40, %v23, 0
  %v45 = vsel %vm40, %v24, 0
  %47 = vmatprep.subr.mxu0 0.0
  %48 = vmatpush1.msra.mxu0 %v25
  %49 = vmatprep.subr.mxu0 0.0
  %50 = vmatpush1.msra.mxu0 %v26
  %51 = vmatprep.subr.mxu0 0.0
  %52 = vmatpush1.msra.mxu0 %v27
  %53 = vmatprep.subr.mxu0 0.0
  %54 = vmatpush1.msra.mxu0 %v28
  %55 = vmatprep.subr.mxu0 0.0
  %56 = vmatpush1.msra.mxu0 %v29
  %57 = vmatprep.subr.mxu0 0.0
  %58 = vmatpush1.msra.mxu0 %v30
  %59 = vmatprep.subr.mxu0 0.0
  %60 = vmatpush1.msra.mxu0 %v31
  %61 = vmatprep.subr.mxu0 0.0
  %62 = vmatpush1.msra.mxu0 %v32
  %63 = vmatprep.subr.mxu0 0.0
  %64 = vmatpush1.msra.mxu0 0.0
  %65 = vmatprep.subr.mxu0 0.0
  %66 = vmatpush1.msra.mxu0 0.0
  %67 = vmatprep.subr.mxu0 0.0
  %68 = vmatpush1.msra.mxu0 0.0
  %69 = vmatprep.subr.mxu0 0.0
  %70 = vmatpush1.msra.mxu0 0.0
  %71 = vmatprep.subr.mxu0 0.0
  %72 = vmatpush1.msra.mxu0 0.0
  %73 = vmatprep.subr.mxu0 0.0
  %74 = vmatpush1.msra.mxu0 0.0
  %75 = vmatprep.subr.mxu0 0.0
  %76 = vmatpush1.msra.mxu0 0.0
  %77 = vmatprep.subr.mxu0 0.0
  %78 = vmatpush1.msra.mxu0 0.0
  %79 = vmatprep.subr.mxu0 0.0
  %80 = vmatpush1.msra.mxu0 0.0
  %81 = vmatprep.subr.mxu0 0.0
  %82 = vmatpush1.msra.mxu0 0.0
  %83 = vmatprep.subr.mxu0 0.0
  %84 = vmatpush1.msra.mxu0 0.0
  %85 = vmatprep.subr.mxu0 0.0
  %86 = vmatpush1.msra.mxu0 0.0
  %87 = vmatprep.subr.mxu0 0.0
  %88 = vmatpush1.msra.mxu0 0.0
  %89 = vmatprep.subr.mxu0 0.0
  %90 = vmatpush1.msra.mxu0 0.0
  %91 = vmatprep.subr.mxu0 0.0
  %92 = vmatpush1.msra.mxu0 0.0
  %93 = vmatprep.subr.mxu0 0.0
  %94 = vmatpush1.msra.mxu0 0.0
  %95 = vmatprep.subr.mxu0 0.0
  %96 = vmatpush1.msra.mxu0 0.0
  %97 = vmatprep.subr.mxu0 0.0
  %98 = vmatpush1.msra.mxu0 0.0
  %99 = vmatprep.subr.mxu0 0.0
  %100 = vmatpush1.msra.mxu0 0.0
  %101 = vmatprep.subr.mxu0 0.0
  %102 = vmatpush1.msra.mxu0 0.0
  %103 = vmatprep.subr.mxu0 0.0
  %104 = vmatpush1.msra.mxu0 0.0
  %105 = vmatprep.subr.mxu0 0.0
  %106 = vmatpush1.msra.mxu0 0.0
  %107 = vmatprep.subr.mxu0 0.0
  %108 = vmatpush1.msra.mxu0 0.0
  %109 = vmatprep.subr.mxu0 0.0
  %110 = vmatpush1.msra.mxu0 0.0
  %111 = vmatprep.mubr.f32.mxu0 0.0
  %112 = vmatmul.mubr.f32.gmra.mrb[0].mxu0 %v42
  %v113 = vpop.f32.mrb[0].mxu0
  %v114 = vadd.f32 %v38, %v113
  %v115 = vpop.f32.mrb[0].mxu0
  %116 = vmatprep.mubr.f32.mxu0 0.0
  %117 = vmatmul.mubr.f32.gmra.mrb[0].mxu0 %v45
  %v118 = vpop.f32.mrb[0].mxu0
  %v119 = vadd.f32 %v38, %v118
  %v120 = vpop.f32.mrb[0].mxu0
  %121 = vdwg.mxu0
  %v122 = vld [vmem:[%s3] sm:$0xff]
  %v123 = vld [vmem:[%s3 + $0x8] sm:$0xff]
  %v124 = vld [vmem:[%s3 + $0x10] sm:$0xff]
  %v125 = vld [vmem:[%s3 + $0x18] sm:$0xff]
  %vm126 = vcmask 261120
  %v128 = vsel %vm126, 0.0, 0
  %130 = vmatprep.subr.mxu0 0.0
  %131 = vmatpush1.msra.mxu0 %v122
  %132 = vmatprep.subr.mxu0 0.0
  %133 = vmatpush1.msra.mxu0 %v123
  %134 = vmatprep.subr.mxu0 0.0
  %135 = vmatpush1.msra.mxu0 %v124
  %136 = vmatprep.subr.mxu0 0.0
  %137 = vmatpush1.msra.mxu0 %v125
  %138 = vmatprep.subr.mxu0 0.0
  %139 = vmatpush1.msra.mxu0 0.0
  %140 = vmatprep.subr.mxu0 0.0
  %141 = vmatpush1.msra.mxu0 0.0
  %142 = vmatprep.subr.mxu0 0.0
  %143 = vmatpush1.msra.mxu0 0.0
  %144 = vmatprep.subr.mxu0 0.0
  %145 = vmatpush1.msra.mxu0 0.0
  %146 = vmatprep.subr.mxu0 0.0
  %147 = vmatpush1.msra.mxu0 0.0
  %148 = vmatprep.subr.mxu0 0.0
  %149 = vmatpush1.msra.mxu0 0.0
  %150 = vmatprep.subr.mxu0 0.0
  %151 = vmatpush1.msra.mxu0 0.0
  %152 = vmatprep.subr.mxu0 0.0
  %153 = vmatpush1.msra.mxu0 0.0
  %154 = vmatprep.subr.mxu0 0.0
  %155 = vmatpush1.msra.mxu0 0.0
  %156 = vmatprep.subr.mxu0 0.0
  %157 = vmatpush1.msra.mxu0 0.0
  %158 = vmatprep.subr.mxu0 0.0
  %159 = vmatpush1.msra.mxu0 0.0
  %160 = vmatprep.subr.mxu0 0.0
  %161 = vmatpush1.msra.mxu0 0.0
  %162 = vmatprep.subr.mxu0 0.0
  %163 = vmatpush1.msra.mxu0 0.0
  %164 = vmatprep.subr.mxu0 0.0
  %165 = vmatpush1.msra.mxu0 0.0
  %166 = vmatprep.subr.mxu0 0.0
  %167 = vmatpush1.msra.mxu0 0.0
  %168 = vmatprep.subr.mxu0 0.0
  %169 = vmatpush1.msra.mxu0 0.0
  %170 = vmatprep.subr.mxu0 0.0
  %171 = vmatpush1.msra.mxu0 0.0
  %172 = vmatprep.subr.mxu0 0.0
  %173 = vmatpush1.msra.mxu0 0.0
  %174 = vmatprep.subr.mxu0 0.0
  %175 = vmatpush1.msra.mxu0 0.0
  %176 = vmatprep.subr.mxu0 0.0
  %177 = vmatpush1.msra.mxu0 0.0
  %178 = vmatprep.subr.mxu0 0.0
  %179 = vmatpush1.msra.mxu0 0.0
  %180 = vmatprep.subr.mxu0 0.0
  %181 = vmatpush1.msra.mxu0 0.0
  %182 = vmatprep.subr.mxu0 0.0
  %183 = vmatpush1.msra.mxu0 0.0
  %184 = vmatprep.subr.mxu0 0.0
  %185 = vmatpush1.msra.mxu0 0.0
  %186 = vmatprep.subr.mxu0 0.0
  %187 = vmatpush1.msra.mxu0 0.0
  %188 = vmatprep.subr.mxu0 0.0
  %189 = vmatpush1.msra.mxu0 0.0
  %190 = vmatprep.subr.mxu0 0.0
  %191 = vmatpush1.msra.mxu0 0.0
  %192 = vmatprep.subr.mxu0 0.0
  %193 = vmatpush1.msra.mxu0 0.0
  %194 = vmatprep.mubr.f32.mxu0 0.0
  %195 = vmatmul.mubr.f32.gmra.mrb[0].mxu0 %v128
  %v196 = vpop.f32.mrb[0].mxu0
  %v197 = vadd.f32 0.0, %v196
  %v198 = vpop.f32.mrb[0].mxu0
  %199 = vdwg.mxu0
  %v200 = vadd.f32 %v114, %v197
  %v201 = vxor.u32 %v200, 2147483648
  %v202 = vmul.f32 %v201, 1.442695
  %v203 = vpow.pop %v202
  %v204 = vadd.f32 %v203, 1.0
  %v205 = vrcp.pop %v204
  %v206 = vmul.f32 1.0, %v205
  %v207 = vtanh.pop %v200
  %v208 = vmul.f32 %v206, 0.0
  %210 = vrot.lane.b32.xlu0 %v207, 32
  %v211 = vpop.permute.xlu0 %210
  %v213 = vmul.f32 %v206, %v211
  %215 = vrot.lane.b32.xlu0 %v213, 32
  %v216 = vpop.permute.xlu0 %215
  %v218 = vadd.f32 %v208, %v216
  %v219 = vtanh.pop %v218
  %221 = vrot.lane.b32.xlu0 %v219, 32
  %v222 = vpop.permute.xlu0 %221
  %v224 = vmul.f32 %v206, %v222
  %226 = vrot.lane.b32.xlu0 %v224, 64
  %v227 = vpop.permute.xlu0 %226
  %v228 = vsel %vm126, %v227, 0
  %230 = vmatprep.subr.mxu0 0.0
  %231 = vmatpush1.msra.mxu0 %v122
  %232 = vmatprep.subr.mxu0 0.0
  %233 = vmatpush1.msra.mxu0 %v123
  %234 = vmatprep.subr.mxu0 0.0
  %235 = vmatpush1.msra.mxu0 %v124
  %236 = vmatprep.subr.mxu0 0.0
  %237 = vmatpush1.msra.mxu0 %v125
  %238 = vmatprep.subr.mxu0 0.0
  %239 = vmatpush1.msra.mxu0 0.0
  %240 = vmatprep.subr.mxu0 0.0
  %241 = vmatpush1.msra.mxu0 0.0
  %242 = vmatprep.subr.mxu0 0.0
  %243 = vmatpush1.msra.mxu0 0.0
  %244 = vmatprep.subr.mxu0 0.0
  %245 = vmatpush1.msra.mxu0 0.0
  %246 = vmatprep.subr.mxu0 0.0
  %247 = vmatpush1.msra.mxu0 0.0
  %248 = vmatprep.subr.mxu0 0.0
  %249 = vmatpush1.msra.mxu0 0.0
  %250 = vmatprep.subr.mxu0 0.0
  %251 = vmatpush1.msra.mxu0 0.0
  %252 = vmatprep.subr.mxu0 0.0
  %253 = vmatpush1.msra.mxu0 0.0
  %254 = vmatprep.subr.mxu0 0.0
  %255 = vmatpush1.msra.mxu0 0.0
  %256 = vmatprep.subr.mxu0 0.0
  %257 = vmatpush1.msra.mxu0 0.0
  %258 = vmatprep.subr.mxu0 0.0
  %259 = vmatpush1.msra.mxu0 0.0
  %260 = vmatprep.subr.mxu0 0.0
  %261 = vmatpush1.msra.mxu0 0.0
  %262 = vmatprep.subr.mxu0 0.0
  %263 = vmatpush1.msra.mxu0 0.0
  %264 = vmatprep.subr.mxu0 0.0
  %265 = vmatpush1.msra.mxu0 0.0
  %266 = vmatprep.subr.mxu0 0.0
  %267 = vmatpush1.msra.mxu0 0.0
  %268 = vmatprep.subr.mxu0 0.0
  %269 = vmatpush1.msra.mxu0 0.0
  %270 = vmatprep.subr.mxu0 0.0
  %271 = vmatpush1.msra.mxu0 0.0
  %272 = vmatprep.subr.mxu0 0.0
  %273 = vmatpush1.msra.mxu0 0.0
  %274 = vmatprep.subr.mxu0 0.0
  %275 = vmatpush1.msra.mxu0 0.0
  %276 = vmatprep.subr.mxu0 0.0
  %277 = vmatpush1.msra.mxu0 0.0
  %278 = vmatprep.subr.mxu0 0.0
  %279 = vmatpush1.msra.mxu0 0.0
  %280 = vmatprep.subr.mxu0 0.0
  %281 = vmatpush1.msra.mxu0 0.0
  %282 = vmatprep.subr.mxu0 0.0
  %283 = vmatpush1.msra.mxu0 0.0
  %284 = vmatprep.subr.mxu0 0.0
  %285 = vmatpush1.msra.mxu0 0.0
  %286 = vmatprep.subr.mxu0 0.0
  %287 = vmatpush1.msra.mxu0 0.0
  %288 = vmatprep.subr.mxu0 0.0
  %289 = vmatpush1.msra.mxu0 0.0
  %290 = vmatprep.subr.mxu0 0.0
  %291 = vmatpush1.msra.mxu0 0.0
  %292 = vmatprep.subr.mxu0 0.0
  %293 = vmatpush1.msra.mxu0 0.0
  %294 = vmatprep.mubr.f32.mxu0 0.0
  %295 = vmatmul.mubr.f32.gmra.mrb[0].mxu0 %v228
  %v296 = vpop.f32.mrb[0].mxu0
  %v297 = vadd.f32 0.0, %v296
  %v298 = vpop.f32.mrb[0].mxu0
  %299 = vdwg.mxu0
  %v301 = vrot.slane %v297, 6
  %v303 = vadd.f32 %v114, %v301
  %v304 = vxor.u32 %v303, 2147483648
  %v305 = vmul.f32 %v304, 1.442695
  %v306 = vpow.pop %v305
  %v307 = vadd.f32 %v306, 1.0
  %v308 = vrcp.pop %v307
  %v309 = vmul.f32 1.0, %v308
  %v310 = vtanh.pop %v303
  %v312 = vrot.slane %v218, 6
  %v314 = vmul.f32 %v309, %v312
  %316 = vrot.lane.b32.xlu0 %v310, 32
  %v317 = vpop.permute.xlu0 %316
  %v319 = vmul.f32 %v309, %v317
  %321 = vrot.lane.b32.xlu0 %v319, 32
  %v322 = vpop.permute.xlu0 %321
  %v324 = vadd.f32 %v314, %v322
  %v325 = vtanh.pop %v324
  %327 = vrot.lane.b32.xlu0 %v325, 32
  %v328 = vpop.permute.xlu0 %327
  %v330 = vmul.f32 %v309, %v328
  %v332 = vrot.slane %v330, 2
  %333 = vrot.lane.b32.xlu0 %v332, 64
  %v334 = vpop.permute.xlu0 %333
  %v335 = vsel %vm126, %v334, 0
  %337 = vmatprep.subr.mxu0 0.0
  %338 = vmatpush1.msra.mxu0 %v122
  %339 = vmatprep.subr.mxu0 0.0
  %340 = vmatpush1.msra.mxu0 %v123
  %341 = vmatprep.subr.mxu0 0.0
  %342 = vmatpush1.msra.mxu0 %v124
  %343 = vmatprep.subr.mxu0 0.0
  %344 = vmatpush1.msra.mxu0 %v125
  %345 = vmatprep.subr.mxu0 0.0
  %346 = vmatpush1.msra.mxu0 0.0
  %347 = vmatprep.subr.mxu0 0.0
  %348 = vmatpush1.msra.mxu0 0.0
  %349 = vmatprep.subr.mxu0 0.0
  %350 = vmatpush1.msra.mxu0 0.0
  %351 = vmatprep.subr.mxu0 0.0
  %352 = vmatpush1.msra.mxu0 0.0
  %353 = vmatprep.subr.mxu0 0.0
  %354 = vmatpush1.msra.mxu0 0.0
  %355 = vmatprep.subr.mxu0 0.0
  %356 = vmatpush1.msra.mxu0 0.0
  %357 = vmatprep.subr.mxu0 0.0
  %358 = vmatpush1.msra.mxu0 0.0
  %359 = vmatprep.subr.mxu0 0.0
  %360 = vmatpush1.msra.mxu0 0.0
  %361 = vmatprep.subr.mxu0 0.0
  %362 = vmatpush1.msra.mxu0 0.0
  %363 = vmatprep.subr.mxu0 0.0
  %364 = vmatpush1.msra.mxu0 0.0
  %365 = vmatprep.subr.mxu0 0.0
  %366 = vmatpush1.msra.mxu0 0.0
  %367 = vmatprep.subr.mxu0 0.0
  %368 = vmatpush1.msra.mxu0 0.0
  %369 = vmatprep.subr.mxu0 0.0
  %370 = vmatpush1.msra.mxu0 0.0
  %371 = vmatprep.subr.mxu0 0.0
  %372 = vmatpush1.msra.mxu0 0.0
  %373 = vmatprep.subr.mxu0 0.0
  %374 = vmatpush1.msra.mxu0 0.0
  %375 = vmatprep.subr.mxu0 0.0
  %376 = vmatpush1.msra.mxu0 0.0
  %377 = vmatprep.subr.mxu0 0.0
  %378 = vmatpush1.msra.mxu0 0.0
  %379 = vmatprep.subr.mxu0 0.0
  %380 = vmatpush1.msra.mxu0 0.0
  %381 = vmatprep.subr.mxu0 0.0
  %382 = vmatpush1.msra.mxu0 0.0
  %383 = vmatprep.subr.mxu0 0.0
  %384 = vmatpush1.msra.mxu0 0.0
  %385 = vmatprep.subr.mxu0 0.0
  %386 = vmatpush1.msra.mxu0 0.0
  %387 = vmatprep.subr.mxu0 0.0
  %388 = vmatpush1.msra.mxu0 0.0
  %389 = vmatprep.subr.mxu0 0.0
  %390 = vmatpush1.msra.mxu0 0.0
  %391 = vmatprep.subr.mxu0 0.0
  %392 = vmatpush1.msra.mxu0 0.0
  %393 = vmatprep.subr.mxu0 0.0
  %394 = vmatpush1.msra.mxu0 0.0
  %395 = vmatprep.subr.mxu0 0.0
  %396 = vmatpush1.msra.mxu0 0.0
  %397 = vmatprep.subr.mxu0 0.0
  %398 = vmatpush1.msra.mxu0 0.0
  %399 = vmatprep.subr.mxu0 0.0
  %400 = vmatpush1.msra.mxu0 0.0
  %401 = vmatprep.mubr.f32.mxu0 0.0
  %402 = vmatmul.mubr.f32.gmra.mrb[0].mxu0 %v335
  %v403 = vpop.f32.mrb[0].mxu0
  %v404 = vadd.f32 0.0, %v403
  %v405 = vpop.f32.mrb[0].mxu0
  %406 = vdwg.mxu0
  %v408 = vrot.slane %v404, 4
  %v410 = vadd.f32 %v114, %v408
  %v411 = vxor.u32 %v410, 2147483648
  %v412 = vmul.f32 %v411, 1.442695
  %v413 = vpow.pop %v412
  %v414 = vadd.f32 %v413, 1.0
  %v415 = vrcp.pop %v414
  %v416 = vmul.f32 1.0, %v415
  %v417 = vtanh.pop %v410
  %v419 = vrot.slane %v324, 6
  %v421 = vmul.f32 %v416, %v419
  %423 = vrot.lane.b32.xlu0 %v417, 32
  %v424 = vpop.permute.xlu0 %423
  %v426 = vmul.f32 %v416, %v424
  %428 = vrot.lane.b32.xlu0 %v426, 32
  %v429 = vpop.permute.xlu0 %428
  %v431 = vadd.f32 %v421, %v429
  %v432 = vtanh.pop %v431
  %434 = vrot.lane.b32.xlu0 %v432, 32
  %v435 = vpop.permute.xlu0 %434
  %v437 = vmul.f32 %v416, %v435
  %v439 = vrot.slane %v437, 4
  %440 = vrot.lane.b32.xlu0 %v439, 64
  %v441 = vpop.permute.xlu0 %440
  %v442 = vsel %vm126, %v441, 0
  %444 = vmatprep.subr.mxu0 0.0
  %445 = vmatpush1.msra.mxu0 %v122
  %446 = vmatprep.subr.mxu0 0.0
  %447 = vmatpush1.msra.mxu0 %v123
  %448 = vmatprep.subr.mxu0 0.0
  %449 = vmatpush1.msra.mxu0 %v124
  %450 = vmatprep.subr.mxu0 0.0
  %451 = vmatpush1.msra.mxu0 %v125
  %452 = vmatprep.subr.mxu0 0.0
  %453 = vmatpush1.msra.mxu0 0.0
  %454 = vmatprep.subr.mxu0 0.0
  %455 = vmatpush1.msra.mxu0 0.0
  %456 = vmatprep.subr.mxu0 0.0
  %457 = vmatpush1.msra.mxu0 0.0
  %458 = vmatprep.subr.mxu0 0.0
  %459 = vmatpush1.msra.mxu0 0.0
  %460 = vmatprep.subr.mxu0 0.0
  %461 = vmatpush1.msra.mxu0 0.0
  %462 = vmatprep.subr.mxu0 0.0
  %463 = vmatpush1.msra.mxu0 0.0
  %464 = vmatprep.subr.mxu0 0.0
  %465 = vmatpush1.msra.mxu0 0.0
  %466 = vmatprep.subr.mxu0 0.0
  %467 = vmatpush1.msra.mxu0 0.0
  %468 = vmatprep.subr.mxu0 0.0
  %469 = vmatpush1.msra.mxu0 0.0
  %470 = vmatprep.subr.mxu0 0.0
  %471 = vmatpush1.msra.mxu0 0.0
  %472 = vmatprep.subr.mxu0 0.0
  %473 = vmatpush1.msra.mxu0 0.0
  %474 = vmatprep.subr.mxu0 0.0
  %475 = vmatpush1.msra.mxu0 0.0
  %476 = vmatprep.subr.mxu0 0.0
  %477 = vmatpush1.msra.mxu0 0.0
  %478 = vmatprep.subr.mxu0 0.0
  %479 = vmatpush1.msra.mxu0 0.0
  %480 = vmatprep.subr.mxu0 0.0
  %481 = vmatpush1.msra.mxu0 0.0
  %482 = vmatprep.subr.mxu0 0.0
  %483 = vmatpush1.msra.mxu0 0.0
  %484 = vmatprep.subr.mxu0 0.0
  %485 = vmatpush1.msra.mxu0 0.0
  %486 = vmatprep.subr.mxu0 0.0
  %487 = vmatpush1.msra.mxu0 0.0
  %488 = vmatprep.subr.mxu0 0.0
  %489 = vmatpush1.msra.mxu0 0.0
  %490 = vmatprep.subr.mxu0 0.0
  %491 = vmatpush1.msra.mxu0 0.0
  %492 = vmatprep.subr.mxu0 0.0
  %493 = vmatpush1.msra.mxu0 0.0
  %494 = vmatprep.subr.mxu0 0.0
  %495 = vmatpush1.msra.mxu0 0.0
  %496 = vmatprep.subr.mxu0 0.0
  %497 = vmatpush1.msra.mxu0 0.0
  %498 = vmatprep.subr.mxu0 0.0
  %499 = vmatpush1.msra.mxu0 0.0
  %500 = vmatprep.subr.mxu0 0.0
  %501 = vmatpush1.msra.mxu0 0.0
  %502 = vmatprep.subr.mxu0 0.0
  %503 = vmatpush1.msra.mxu0 0.0
  %504 = vmatprep.subr.mxu0 0.0
  %505 = vmatpush1.msra.mxu0 0.0
  %506 = vmatprep.subr.mxu0 0.0
  %507 = vmatpush1.msra.mxu0 0.0
  %508 = vmatprep.mubr.f32.mxu0 0.0
  %509 = vmatmul.mubr.f32.gmra.mrb[0].mxu0 %v442
  %v510 = vpop.f32.mrb[0].mxu0
  %v511 = vadd.f32 0.0, %v510
  %v512 = vpop.f32.mrb[0].mxu0
  %513 = vdwg.mxu0
  %v515 = vrot.slane %v511, 2
  %v517 = vadd.f32 %v114, %v515
  %v518 = vxor.u32 %v517, 2147483648
  %v519 = vmul.f32 %v518, 1.442695
  %v520 = vpow.pop %v519
  %v521 = vadd.f32 %v520, 1.0
  %v522 = vrcp.pop %v521
  %v523 = vmul.f32 1.0, %v522
  %v524 = vtanh.pop %v517
  %v526 = vrot.slane %v431, 6
  %v528 = vmul.f32 %v523, %v526
  %530 = vrot.lane.b32.xlu0 %v524, 32
  %v531 = vpop.permute.xlu0 %530
  %v533 = vmul.f32 %v523, %v531
  %535 = vrot.lane.b32.xlu0 %v533, 32
  %v536 = vpop.permute.xlu0 %535
  %v538 = vadd.f32 %v528, %v536
  %v539 = vtanh.pop %v538
  %541 = vrot.lane.b32.xlu0 %v539, 32
  %v542 = vpop.permute.xlu0 %541
  %v544 = vmul.f32 %v523, %v542
  %v546 = vrot.slane %v544, 6
  %547 = vrot.lane.b32.xlu0 %v546, 64
  %v548 = vpop.permute.xlu0 %547
  %v549 = vsel %vm126, %v548, 0
  %551 = vmatprep.subr.mxu0 0.0
  %552 = vmatpush1.msra.mxu0 %v122
  %553 = vmatprep.subr.mxu0 0.0
  %554 = vmatpush1.msra.mxu0 %v123
  %555 = vmatprep.subr.mxu0 0.0
  %556 = vmatpush1.msra.mxu0 %v124
  %557 = vmatprep.subr.mxu0 0.0
  %558 = vmatpush1.msra.mxu0 %v125
  %559 = vmatprep.subr.mxu0 0.0
  %560 = vmatpush1.msra.mxu0 0.0
  %561 = vmatprep.subr.mxu0 0.0
  %562 = vmatpush1.msra.mxu0 0.0
  %563 = vmatprep.subr.mxu0 0.0
  %564 = vmatpush1.msra.mxu0 0.0
  %565 = vmatprep.subr.mxu0 0.0
  %566 = vmatpush1.msra.mxu0 0.0
  %567 = vmatprep.subr.mxu0 0.0
  %568 = vmatpush1.msra.mxu0 0.0
  %569 = vmatprep.subr.mxu0 0.0
  %570 = vmatpush1.msra.mxu0 0.0
  %571 = vmatprep.subr.mxu0 0.0
  %572 = vmatpush1.msra.mxu0 0.0
  %573 = vmatprep.subr.mxu0 0.0
  %574 = vmatpush1.msra.mxu0 0.0
  %575 = vmatprep.subr.mxu0 0.0
  %576 = vmatpush1.msra.mxu0 0.0
  %577 = vmatprep.subr.mxu0 0.0
  %578 = vmatpush1.msra.mxu0 0.0
  %579 = vmatprep.subr.mxu0 0.0
  %580 = vmatpush1.msra.mxu0 0.0
  %581 = vmatprep.subr.mxu0 0.0
  %582 = vmatpush1.msra.mxu0 0.0
  %583 = vmatprep.subr.mxu0 0.0
  %584 = vmatpush1.msra.mxu0 0.0
  %585 = vmatprep.subr.mxu0 0.0
  %586 = vmatpush1.msra.mxu0 0.0
  %587 = vmatprep.subr.mxu0 0.0
  %588 = vmatpush1.msra.mxu0 0.0
  %589 = vmatprep.subr.mxu0 0.0
  %590 = vmatpush1.msra.mxu0 0.0
  %591 = vmatprep.subr.mxu0 0.0
  %592 = vmatpush1.msra.mxu0 0.0
  %593 = vmatprep.subr.mxu0 0.0
  %594 = vmatpush1.msra.mxu0 0.0
  %595 = vmatprep.subr.mxu0 0.0
  %596 = vmatpush1.msra.mxu0 0.0
  %597 = vmatprep.subr.mxu0 0.0
  %598 = vmatpush1.msra.mxu0 0.0
  %599 = vmatprep.subr.mxu0 0.0
  %600 = vmatpush1.msra.mxu0 0.0
  %601 = vmatprep.subr.mxu0 0.0
  %602 = vmatpush1.msra.mxu0 0.0
  %603 = vmatprep.subr.mxu0 0.0
  %604 = vmatpush1.msra.mxu0 0.0
  %605 = vmatprep.subr.mxu0 0.0
  %606 = vmatpush1.msra.mxu0 0.0
  %607 = vmatprep.subr.mxu0 0.0
  %608 = vmatpush1.msra.mxu0 0.0
  %609 = vmatprep.subr.mxu0 0.0
  %610 = vmatpush1.msra.mxu0 0.0
  %611 = vmatprep.subr.mxu0 0.0
  %612 = vmatpush1.msra.mxu0 0.0
  %613 = vmatprep.subr.mxu0 0.0
  %614 = vmatpush1.msra.mxu0 0.0
  %615 = vmatprep.mubr.f32.mxu0 0.0
  %616 = vmatmul.mubr.f32.gmra.mrb[0].mxu0 %v549
  %v617 = vpop.f32.mrb[0].mxu0
  %v618 = vadd.f32 0.0, %v617
  %v619 = vpop.f32.mrb[0].mxu0
  %620 = vdwg.mxu0
  %v621 = vadd.f32 %v119, %v618
  %v622 = vxor.u32 %v621, 2147483648
  %v623 = vmul.f32 %v622, 1.442695
  %v624 = vpow.pop %v623
  %v625 = vadd.f32 %v624, 1.0
  %v626 = vrcp.pop %v625
  %v627 = vmul.f32 1.0, %v626
  %v628 = vtanh.pop %v621
  %v630 = vrot.slane %v538, 6
  %v632 = vmul.f32 %v627, %v630
  %634 = vrot.lane.b32.xlu0 %v628, 32
  %v635 = vpop.permute.xlu0 %634
  %v637 = vmul.f32 %v627, %v635
  %639 = vrot.lane.b32.xlu0 %v637, 32
  %v640 = vpop.permute.xlu0 %639
  %v642 = vadd.f32 %v632, %v640
  %v643 = vtanh.pop %v642
  %645 = vrot.lane.b32.xlu0 %v643, 32
  %v646 = vpop.permute.xlu0 %645
  %v648 = vmul.f32 %v627, %v646
  %650 = vrot.lane.b32.xlu0 %v648, 64
  %v651 = vpop.permute.xlu0 %650
  %v652 = vsel %vm126, %v651, 0
  %654 = vmatprep.subr.mxu0 0.0
  %655 = vmatpush1.msra.mxu0 %v122
  %656 = vmatprep.subr.mxu0 0.0
  %657 = vmatpush1.msra.mxu0 %v123
  %658 = vmatprep.subr.mxu0 0.0
  %659 = vmatpush1.msra.mxu0 %v124
  %660 = vmatprep.subr.mxu0 0.0
  %661 = vmatpush1.msra.mxu0 %v125
  %662 = vmatprep.subr.mxu0 0.0
  %663 = vmatpush1.msra.mxu0 0.0
  %664 = vmatprep.subr.mxu0 0.0
  %665 = vmatpush1.msra.mxu0 0.0
  %666 = vmatprep.subr.mxu0 0.0
  %667 = vmatpush1.msra.mxu0 0.0
  %668 = vmatprep.subr.mxu0 0.0
  %669 = vmatpush1.msra.mxu0 0.0
  %670 = vmatprep.subr.mxu0 0.0
  %671 = vmatpush1.msra.mxu0 0.0
  %672 = vmatprep.subr.mxu0 0.0
  %673 = vmatpush1.msra.mxu0 0.0
  %674 = vmatprep.subr.mxu0 0.0
  %675 = vmatpush1.msra.mxu0 0.0
  %676 = vmatprep.subr.mxu0 0.0
  %677 = vmatpush1.msra.mxu0 0.0
  %678 = vmatprep.subr.mxu0 0.0
  %679 = vmatpush1.msra.mxu0 0.0
  %680 = vmatprep.subr.mxu0 0.0
  %681 = vmatpush1.msra.mxu0 0.0
  %682 = vmatprep.subr.mxu0 0.0
  %683 = vmatpush1.msra.mxu0 0.0
  %684 = vmatprep.subr.mxu0 0.0
  %685 = vmatpush1.msra.mxu0 0.0
  %686 = vmatprep.subr.mxu0 0.0
  %687 = vmatpush1.msra.mxu0 0.0
  %688 = vmatprep.subr.mxu0 0.0
  %689 = vmatpush1.msra.mxu0 0.0
  %690 = vmatprep.subr.mxu0 0.0
  %691 = vmatpush1.msra.mxu0 0.0
  %692 = vmatprep.subr.mxu0 0.0
  %693 = vmatpush1.msra.mxu0 0.0
  %694 = vmatprep.subr.mxu0 0.0
  %695 = vmatpush1.msra.mxu0 0.0
  %696 = vmatprep.subr.mxu0 0.0
  %697 = vmatpush1.msra.mxu0 0.0
  %698 = vmatprep.subr.mxu0 0.0
  %699 = vmatpush1.msra.mxu0 0.0
  %700 = vmatprep.subr.mxu0 0.0
  %701 = vmatpush1.msra.mxu0 0.0
  %702 = vmatprep.subr.mxu0 0.0
  %703 = vmatpush1.msra.mxu0 0.0
  %704 = vmatprep.subr.mxu0 0.0
  %705 = vmatpush1.msra.mxu0 0.0
  %706 = vmatprep.subr.mxu0 0.0
  %707 = vmatpush1.msra.mxu0 0.0
  %708 = vmatprep.subr.mxu0 0.0
  %709 = vmatpush1.msra.mxu0 0.0
  %710 = vmatprep.subr.mxu0 0.0
  %711 = vmatpush1.msra.mxu0 0.0
  %712 = vmatprep.subr.mxu0 0.0
  %713 = vmatpush1.msra.mxu0 0.0
  %714 = vmatprep.subr.mxu0 0.0
  %715 = vmatpush1.msra.mxu0 0.0
  %716 = vmatprep.subr.mxu0 0.0
  %717 = vmatpush1.msra.mxu0 0.0
  %718 = vmatprep.mubr.f32.mxu0 0.0
  %719 = vmatmul.mubr.f32.gmra.mrb[0].mxu0 %v652
  %v720 = vpop.f32.mrb[0].mxu0
  %v721 = vadd.f32 0.0, %v720
  %v722 = vpop.f32.mrb[0].mxu0
  %723 = vdwg.mxu0
  %v725 = vrot.slane %v721, 6
  %v727 = vadd.f32 %v119, %v725
  %v728 = vxor.u32 %v727, 2147483648
  %v729 = vmul.f32 %v728, 1.442695
  %v730 = vpow.pop %v729
  %v731 = vadd.f32 %v730, 1.0
  %v732 = vrcp.pop %v731
  %v733 = vmul.f32 1.0, %v732
  %v734 = vtanh.pop %v727
  %v736 = vrot.slane %v642, 6
  %v738 = vmul.f32 %v733, %v736
  %740 = vrot.lane.b32.xlu0 %v734, 32
  %v741 = vpop.permute.xlu0 %740
  %v743 = vmul.f32 %v733, %v741
  %745 = vrot.lane.b32.xlu0 %v743, 32
  %v746 = vpop.permute.xlu0 %745
  %v748 = vadd.f32 %v738, %v746
  %v749 = vtanh.pop %v748
  %751 = vrot.lane.b32.xlu0 %v749, 32
  %v752 = vpop.permute.xlu0 %751
  %v754 = vmul.f32 %v733, %v752
  %v756 = vrot.slane %v754, 2
  %757 = vrot.lane.b32.xlu0 %v756, 64
  %v758 = vpop.permute.xlu0 %757
  %v759 = vsel %vm126, %v758, 0
  %761 = vmatprep.subr.mxu0 0.0
  %762 = vmatpush1.msra.mxu0 %v122
  %763 = vmatprep.subr.mxu0 0.0
  %764 = vmatpush1.msra.mxu0 %v123
  %765 = vmatprep.subr.mxu0 0.0
  %766 = vmatpush1.msra.mxu0 %v124
  %767 = vmatprep.subr.mxu0 0.0
  %768 = vmatpush1.msra.mxu0 %v125
  %769 = vmatprep.subr.mxu0 0.0
  %770 = vmatpush1.msra.mxu0 0.0
  %771 = vmatprep.subr.mxu0 0.0
  %772 = vmatpush1.msra.mxu0 0.0
  %773 = vmatprep.subr.mxu0 0.0
  %774 = vmatpush1.msra.mxu0 0.0
  %775 = vmatprep.subr.mxu0 0.0
  %776 = vmatpush1.msra.mxu0 0.0
  %777 = vmatprep.subr.mxu0 0.0
  %778 = vmatpush1.msra.mxu0 0.0
  %779 = vmatprep.subr.mxu0 0.0
  %780 = vmatpush1.msra.mxu0 0.0
  %781 = vmatprep.subr.mxu0 0.0
  %782 = vmatpush1.msra.mxu0 0.0
  %783 = vmatprep.subr.mxu0 0.0
  %784 = vmatpush1.msra.mxu0 0.0
  %785 = vmatprep.subr.mxu0 0.0
  %786 = vmatpush1.msra.mxu0 0.0
  %787 = vmatprep.subr.mxu0 0.0
  %788 = vmatpush1.msra.mxu0 0.0
  %789 = vmatprep.subr.mxu0 0.0
  %790 = vmatpush1.msra.mxu0 0.0
  %791 = vmatprep.subr.mxu0 0.0
  %792 = vmatpush1.msra.mxu0 0.0
  %793 = vmatprep.subr.mxu0 0.0
  %794 = vmatpush1.msra.mxu0 0.0
  %795 = vmatprep.subr.mxu0 0.0
  %796 = vmatpush1.msra.mxu0 0.0
  %797 = vmatprep.subr.mxu0 0.0
  %798 = vmatpush1.msra.mxu0 0.0
  %799 = vmatprep.subr.mxu0 0.0
  %800 = vmatpush1.msra.mxu0 0.0
  %801 = vmatprep.subr.mxu0 0.0
  %802 = vmatpush1.msra.mxu0 0.0
  %803 = vmatprep.subr.mxu0 0.0
  %804 = vmatpush1.msra.mxu0 0.0
  %805 = vmatprep.subr.mxu0 0.0
  %806 = vmatpush1.msra.mxu0 0.0
  %807 = vmatprep.subr.mxu0 0.0
  %808 = vmatpush1.msra.mxu0 0.0
  %809 = vmatprep.subr.mxu0 0.0
  %810 = vmatpush1.msra.mxu0 0.0
  %811 = vmatprep.subr.mxu0 0.0
  %812 = vmatpush1.msra.mxu0 0.0
  %813 = vmatprep.subr.mxu0 0.0
  %814 = vmatpush1.msra.mxu0 0.0
  %815 = vmatprep.subr.mxu0 0.0
  %816 = vmatpush1.msra.mxu0 0.0
  %817 = vmatprep.subr.mxu0 0.0
  %818 = vmatpush1.msra.mxu0 0.0
  %819 = vmatprep.subr.mxu0 0.0
  %820 = vmatpush1.msra.mxu0 0.0
  %821 = vmatprep.subr.mxu0 0.0
  %822 = vmatpush1.msra.mxu0 0.0
  %823 = vmatprep.subr.mxu0 0.0
  %824 = vmatpush1.msra.mxu0 0.0
  %825 = vmatprep.mubr.f32.mxu0 0.0
  %826 = vmatmul.mubr.f32.gmra.mrb[0].mxu0 %v759
  %v827 = vpop.f32.mrb[0].mxu0
  %v828 = vadd.f32 0.0, %v827
  %v829 = vpop.f32.mrb[0].mxu0
  %830 = vdwg.mxu0
  %v832 = vrot.slane %v828, 4
  %v834 = vadd.f32 %v119, %v832
  %v835 = vxor.u32 %v834, 2147483648
  %v836 = vmul.f32 %v835, 1.442695
  %v837 = vpow.pop %v836
  %v838 = vadd.f32 %v837, 1.0
  %v839 = vrcp.pop %v838
  %v840 = vmul.f32 1.0, %v839
  %v841 = vtanh.pop %v834
  %v843 = vrot.slane %v748, 6
  %v845 = vmul.f32 %v840, %v843
  %847 = vrot.lane.b32.xlu0 %v841, 32
  %v848 = vpop.permute.xlu0 %847
  %v850 = vmul.f32 %v840, %v848
  %852 = vrot.lane.b32.xlu0 %v850, 32
  %v853 = vpop.permute.xlu0 %852
  %v855 = vadd.f32 %v845, %v853
  %v856 = vtanh.pop %v855
  %858 = vrot.lane.b32.xlu0 %v856, 32
  %v859 = vpop.permute.xlu0 %858
  %v861 = vmul.f32 %v840, %v859
  %v863 = vrot.slane %v861, 4
  %864 = vrot.lane.b32.xlu0 %v863, 64
  %v865 = vpop.permute.xlu0 %864
  %v866 = vsel %vm126, %v865, 0
  %868 = vmatprep.subr.mxu0 0.0
  %869 = vmatpush1.msra.mxu0 %v122
  %870 = vmatprep.subr.mxu0 0.0
  %871 = vmatpush1.msra.mxu0 %v123
  %872 = vmatprep.subr.mxu0 0.0
  %873 = vmatpush1.msra.mxu0 %v124
  %874 = vmatprep.subr.mxu0 0.0
  %875 = vmatpush1.msra.mxu0 %v125
  %876 = vmatprep.subr.mxu0 0.0
  %877 = vmatpush1.msra.mxu0 0.0
  %878 = vmatprep.subr.mxu0 0.0
  %879 = vmatpush1.msra.mxu0 0.0
  %880 = vmatprep.subr.mxu0 0.0
  %881 = vmatpush1.msra.mxu0 0.0
  %882 = vmatprep.subr.mxu0 0.0
  %883 = vmatpush1.msra.mxu0 0.0
  %884 = vmatprep.subr.mxu0 0.0
  %885 = vmatpush1.msra.mxu0 0.0
  %886 = vmatprep.subr.mxu0 0.0
  %887 = vmatpush1.msra.mxu0 0.0
  %888 = vmatprep.subr.mxu0 0.0
  %889 = vmatpush1.msra.mxu0 0.0
  %890 = vmatprep.subr.mxu0 0.0
  %891 = vmatpush1.msra.mxu0 0.0
  %892 = vmatprep.subr.mxu0 0.0
  %893 = vmatpush1.msra.mxu0 0.0
  %894 = vmatprep.subr.mxu0 0.0
  %895 = vmatpush1.msra.mxu0 0.0
  %896 = vmatprep.subr.mxu0 0.0
  %897 = vmatpush1.msra.mxu0 0.0
  %898 = vmatprep.subr.mxu0 0.0
  %899 = vmatpush1.msra.mxu0 0.0
  %900 = vmatprep.subr.mxu0 0.0
  %901 = vmatpush1.msra.mxu0 0.0
  %902 = vmatprep.subr.mxu0 0.0
  %903 = vmatpush1.msra.mxu0 0.0
  %904 = vmatprep.subr.mxu0 0.0
  %905 = vmatpush1.msra.mxu0 0.0
  %906 = vmatprep.subr.mxu0 0.0
  %907 = vmatpush1.msra.mxu0 0.0
  %908 = vmatprep.subr.mxu0 0.0
  %909 = vmatpush1.msra.mxu0 0.0
  %910 = vmatprep.subr.mxu0 0.0
  %911 = vmatpush1.msra.mxu0 0.0
  %912 = vmatprep.subr.mxu0 0.0
  %913 = vmatpush1.msra.mxu0 0.0
  %914 = vmatprep.subr.mxu0 0.0
  %915 = vmatpush1.msra.mxu0 0.0
  %916 = vmatprep.subr.mxu0 0.0
  %917 = vmatpush1.msra.mxu0 0.0
  %918 = vmatprep.subr.mxu0 0.0
  %919 = vmatpush1.msra.mxu0 0.0
  %920 = vmatprep.subr.mxu0 0.0
  %921 = vmatpush1.msra.mxu0 0.0
  %922 = vmatprep.subr.mxu0 0.0
  %923 = vmatpush1.msra.mxu0 0.0
  %924 = vmatprep.subr.mxu0 0.0
  %925 = vmatpush1.msra.mxu0 0.0
  %926 = vmatprep.subr.mxu0 0.0
  %927 = vmatpush1.msra.mxu0 0.0
  %928 = vmatprep.subr.mxu0 0.0
  %929 = vmatpush1.msra.mxu0 0.0
  %930 = vmatprep.subr.mxu0 0.0
  %931 = vmatpush1.msra.mxu0 0.0
  %932 = vmatprep.mubr.f32.mxu0 0.0
  %933 = vmatmul.mubr.f32.gmra.mrb[0].mxu0 %v866
  %v934 = vpop.f32.mrb[0].mxu0
  %v935 = vadd.f32 0.0, %v934
  %v936 = vpop.f32.mrb[0].mxu0
  %937 = vdwg.mxu0
  %v939 = vrot.slane %v935, 2
  %v941 = vadd.f32 %v119, %v939
  %v942 = vxor.u32 %v941, 2147483648
  %v943 = vmul.f32 %v942, 1.442695
  %v944 = vpow.pop %v943
  %v945 = vadd.f32 %v944, 1.0
  %v946 = vrcp.pop %v945
  %v947 = vmul.f32 1.0, %v946
  %v948 = vtanh.pop %v941
  %v950 = vrot.slane %v855, 6
  %v952 = vmul.f32 %v947, %v950
  %954 = vrot.lane.b32.xlu0 %v948, 32
  %v955 = vpop.permute.xlu0 %954
  %v957 = vmul.f32 %v947, %v955
  %959 = vrot.lane.b32.xlu0 %v957, 32
  %v960 = vpop.permute.xlu0 %959
  %v962 = vadd.f32 %v952, %v960
  %v963 = vtanh.pop %v962
  %965 = vrot.lane.b32.xlu0 %v963, 32
  %v966 = vpop.permute.xlu0 %965
  %v968 = vmul.f32 %v947, %v966
  %vm969 = vcmask 1041408
  %v970 = vsel %vm969, %v224, %v330
  %vm971 = vcmask 1043456
  %v972 = vsel %vm971, %v970, %v437
  %vm973 = vcmask 1045504
  %v974 = vsel %vm973, %v972, %v544
  %v975 = vsel %vm969, %v648, %v754
  %v976 = vsel %vm971, %v975, %v861
  %v977 = vsel %vm973, %v976, %v968
  %v979 = vrot.slane %v968, 6
  %v981 = vrot.slane %v861, 2
  %v983 = vrot.slane %v754, 6
  %v985 = vrot.slane %v648, 2
  %v988 = vrot.slane %v437, 2
  %v990 = vrot.slane %v330, 6
  %v992 = vrot.slane %v224, 2
  %v994 = vsel %vm969, %v979, %v981
  %v995 = vsel %vm971, %v994, %v983
  %v996 = vsel %vm973, %v995, %v985
  %v997 = vsel %vm969, %v546, %v988
  %v998 = vsel %vm971, %v997, %v990
  %v999 = vsel %vm973, %v998, %v992
  %1002 = vrot.lane.b32.xlu0 %v974, 64
  %v1003 = vpop.permute.xlu0 %1002
  %1004 = vrot.lane.b32.xlu0 %v977, 64
  %v1005 = vpop.permute.xlu0 %1004
  %1010 = vrot.lane.b32.xlu0 %v996, 64
  %v1011 = vpop.permute.xlu0 %1010
  %1012 = vrot.lane.b32.xlu0 %v999, 64
  %v1013 = vpop.permute.xlu0 %1012
  %vm1016 = vcmask 130048
  %v1017 = vsel %vm1016, %v1003, %v1011
  %v1018 = vsel %vm1016, %v1005, %v1013
  %v1019 = vld [vmem:[%s4] sm:$0xff]
  %v1020 = vld [vmem:[%s4 + $0x8] sm:$0xff]
  %v1021 = vld [vmem:[%s4 + $0x10] sm:$0xff]
  %v1022 = vld [vmem:[%s4 + $0x18] sm:$0xff]
  %v1023 = vld [vmem:[%s5] sm:$0x1]
  %v1025 = vlaneseq
  %v1026 = vshrl.u32 %v1025, 7
  %v1027 = vsub.s32 0, %v1026
  %v1028 = vrot.slane %v1023, %v1027
  %v1031 = vsel %vm126, %v1017, 0
  %v1034 = vsel %vm126, %v1018, 0
  %1036 = vmatprep.subr.mxu0 0.0
  %1037 = vmatpush1.msra.mxu0 %v1019
  %1038 = vmatprep.subr.mxu0 0.0
  %1039 = vmatpush1.msra.mxu0 %v1020
  %1040 = vmatprep.subr.mxu0 0.0
  %1041 = vmatpush1.msra.mxu0 %v1021
  %1042 = vmatprep.subr.mxu0 0.0
  %1043 = vmatpush1.msra.mxu0 %v1022
  %1044 = vmatprep.subr.mxu0 0.0
  %1045 = vmatpush1.msra.mxu0 0.0
  %1046 = vmatprep.subr.mxu0 0.0
  %1047 = vmatpush1.msra.mxu0 0.0
  %1048 = vmatprep.subr.mxu0 0.0
  %1049 = vmatpush1.msra.mxu0 0.0
  %1050 = vmatprep.subr.mxu0 0.0
  %1051 = vmatpush1.msra.mxu0 0.0
  %1052 = vmatprep.subr.mxu0 0.0
  %1053 = vmatpush1.msra.mxu0 0.0
  %1054 = vmatprep.subr.mxu0 0.0
  %1055 = vmatpush1.msra.mxu0 0.0
  %1056 = vmatprep.subr.mxu0 0.0
  %1057 = vmatpush1.msra.mxu0 0.0
  %1058 = vmatprep.subr.mxu0 0.0
  %1059 = vmatpush1.msra.mxu0 0.0
  %1060 = vmatprep.subr.mxu0 0.0
  %1061 = vmatpush1.msra.mxu0 0.0
  %1062 = vmatprep.subr.mxu0 0.0
  %1063 = vmatpush1.msra.mxu0 0.0
  %1064 = vmatprep.subr.mxu0 0.0
  %1065 = vmatpush1.msra.mxu0 0.0
  %1066 = vmatprep.subr.mxu0 0.0
  %1067 = vmatpush1.msra.mxu0 0.0
  %1068 = vmatprep.subr.mxu0 0.0
  %1069 = vmatpush1.msra.mxu0 0.0
  %1070 = vmatprep.subr.mxu0 0.0
  %1071 = vmatpush1.msra.mxu0 0.0
  %1072 = vmatprep.subr.mxu0 0.0
  %1073 = vmatpush1.msra.mxu0 0.0
  %1074 = vmatprep.subr.mxu0 0.0
  %1075 = vmatpush1.msra.mxu0 0.0
  %1076 = vmatprep.subr.mxu0 0.0
  %1077 = vmatpush1.msra.mxu0 0.0
  %1078 = vmatprep.subr.mxu0 0.0
  %1079 = vmatpush1.msra.mxu0 0.0
  %1080 = vmatprep.subr.mxu0 0.0
  %1081 = vmatpush1.msra.mxu0 0.0
  %1082 = vmatprep.subr.mxu0 0.0
  %1083 = vmatpush1.msra.mxu0 0.0
  %1084 = vmatprep.subr.mxu0 0.0
  %1085 = vmatpush1.msra.mxu0 0.0
  %1086 = vmatprep.subr.mxu0 0.0
  %1087 = vmatpush1.msra.mxu0 0.0
  %1088 = vmatprep.subr.mxu0 0.0
  %1089 = vmatpush1.msra.mxu0 0.0
  %1090 = vmatprep.subr.mxu0 0.0
  %1091 = vmatpush1.msra.mxu0 0.0
  %1092 = vmatprep.subr.mxu0 0.0
  %1093 = vmatpush1.msra.mxu0 0.0
  %1094 = vmatprep.subr.mxu0 0.0
  %1095 = vmatpush1.msra.mxu0 0.0
  %1096 = vmatprep.subr.mxu0 0.0
  %1097 = vmatpush1.msra.mxu0 0.0
  %1098 = vmatprep.subr.mxu0 0.0
  %1099 = vmatpush1.msra.mxu0 0.0
  %1100 = vmatprep.mubr.f32.mxu0 0.0
  %1101 = vmatmul.mubr.f32.gmra.mrb[0].mxu0 %v1031
  %v1102 = vpop.f32.mrb[0].mxu0
  %v1103 = vadd.f32 %v1028, %v1102
  %v1104 = vpop.f32.mrb[0].mxu0
  %1105 = vmatprep.mubr.f32.mxu0 0.0
  %1106 = vmatmul.mubr.f32.gmra.mrb[0].mxu0 %v1034
  %v1107 = vpop.f32.mrb[0].mxu0
  %v1108 = vadd.f32 %v1028, %v1107
  %v1109 = vpop.f32.mrb[0].mxu0
  %1110 = vdwg.mxu0
  %v1111 = vlaneseq
  %v1112 = vand.u32 %v1111, 127
  %v1113 = vcvt.s32.f32 %v1112
  %vm1114 = vcmask 72704
  %v1115 = vsel %vm1114, %v1103, -inf
  %1116 = vmax.xlane.f32.xlu0 %v1115
  %v1117 = vpop.xlane.xlu0 %1116
  %v1118 = vsel %vm1114, %v1108, -inf
  %1119 = vmax.xlane.f32.xlu0 %v1118
  %v1120 = vpop.xlane.xlu0 %1119
  %vm1121 = vcmp.eq.f32.partialorder %v1103, %v1117
  %vm1122 = vcmp.eq.f32.partialorder %v1108, %v1120
  %v1123 = vsel %vm1121, %v1113, 9.0
  %v1124 = vsel %vm1122, %v1113, 9.0
  %v1125 = vsel %vm1114, %v1123, inf
  %1126 = vmin.xlane.f32.xlu0 %v1125
  %v1127 = vpop.xlane.xlu0 %1126
  %v1128 = vsel %vm1114, %v1124, inf
  %1129 = vmin.xlane.f32.xlu0 %v1128
  %v1130 = vpop.xlane.xlu0 %1129
  %v1131 = vcvt.f32.s32.to.zero.pseudo %v1127
  %v1132 = vcvt.f32.s32.to.zero.pseudo %v1130
  %vm1133 = vcmask 7168
  %1134 = vst.msk [vmem:[%s6] sm:$0xff] %vm1133, %v1131
  %1135 = vst.msk [vmem:[%s6 + $0x8] sm:$0xff] %vm1133, %v1132
  // Predicated region
  $region26: #{luke_lstm_head.1} parent=0 // pred_check
    _
  $region27: #{luke_lstm_head.1} parent=0 // pred_check_branch
    %1137 = sbr.rel (0) target = $region29
  $region28: #{luke_lstm_head.1} parent=0 // pred_region
    _
  $region29: #{luke_lstm_head.1} parent=0 // pred_fallthru
    _
  // Predicated region
  $region30: #{luke_lstm_head.1} parent=0 // pred_check
    _
  $region31: #{luke_lstm_head.1} parent=0 // pred_check_branch
    %1139 = sbr.rel (0) target = $region33
  $region32: #{luke_lstm_head.1} parent=0 // pred_region
    _
  $region33: #{luke_lstm_head.1} parent=0 // pred_fallthru
    _

</llo_original>
